<compile_context>
chip_gen: v6e
topology: v6e:2x2x1
jax: 0.10.0
libtpu: 0.0.40
codegen_flags: <defaults>
</compile_context>

<pallas_src>
import functools

import jax
import jax.numpy as jnp
from jax.experimental import pallas as pl
from jax.experimental.pallas import tpu as pltpu


# ----------------------------------------------------------------------------
# VMEM budget (per generation, with a conservative fallback)
# ----------------------------------------------------------------------------
def _vmem_limit_bytes(frac=0.6):
    try:
        info = pltpu.get_tpu_info()
        cap = getattr(info, "vmem_capacity_bytes", None)
        if cap:
            return int(cap * frac)
    except Exception:
        pass
    return 40 * 1024 * 1024   # safe on v5e/v6e (128 MiB) and v7x (64 MiB)


# ----------------------------------------------------------------------------
# Kernel 1: fused QKV projection  y_i = x_i @ W^T + b   (all three share W, b)
# The softmax scale is folded into the Q output (f32, before any bf16 cast).
# ----------------------------------------------------------------------------
def _qkv_linear_kernel(xq_ref, xk_ref, xv_ref, w_ref, b_ref,
                       q_ref, k_ref, v_ref, *, scale):
    w = w_ref[...]                 # (E_out, E_in), resident across the grid
    b = b_ref[...]                 # (1, E_out), f32
    dn = (((1,), (1,)), ((), ()))  # contract dim 1 of x with dim 1 of W => x @ W^T
    for x_ref, o_ref, s in ((xq_ref, q_ref, scale),
                            (xk_ref, k_ref, None),
                            (xv_ref, v_ref, None)):
        acc = jax.lax.dot_general(
            x_ref[...].astype(w.dtype), w, dimension_numbers=dn,
            preferred_element_type=jnp.float32)
        acc = acc + b
        if s is not None:              # fold softmax scale into Q (f32)
            acc = acc * s
        o_ref[...] = acc.astype(o_ref.dtype)


def _pick_tm(M, E_in, E_out, out_bytes, budget, tm_max):
    """Largest row tile (multiple of 8) whose double-buffered 3-in/3-out
    blocks + a (possibly double-buffered) resident weight fit the budget."""
    w_bytes = E_out * E_in * out_bytes
    for t in (1024, 512, 256, 128, 64, 32, 16, 8):
        if t > min(M, tm_max):
            continue
        blocks = 2 * 3 * t * (E_in * 4 + E_out * out_bytes)
        if 2 * w_bytes + blocks + (1 << 20) <= budget:
            return t
    return M if M < 8 else 8


def qkv_projection(xq2, xk2, xv2, w, b, scale, *,
                   compute_dtype=jnp.bfloat16, out_dtype=jnp.bfloat16,
                   tm_max=512):
    """xq2/xk2/xv2: (M, E_in). Returns three (M, E_out) arrays in out_dtype.
    The Q output already carries the softmax scale."""
    M, E_in = xq2.shape
    E_out = w.shape[0]

    budget = _vmem_limit_bytes()
    out_bytes = jnp.dtype(out_dtype).itemsize
    tm = _pick_tm(M, E_in, E_out, out_bytes, budget, tm_max)

    w = w.astype(compute_dtype)                       # resident weight (bf16 on fast path)
    b2 = b.reshape(1, E_out).astype(jnp.float32)      # bias stays f32

    x_spec = pl.BlockSpec((tm, E_in), lambda i: (i, 0))
    o_spec = pl.BlockSpec((tm, E_out), lambda i: (i, 0))
    out_sds = jax.ShapeDtypeStruct((M, E_out), out_dtype)

    return pl.pallas_call(
        functools.partial(_qkv_linear_kernel, scale=scale),
        out_shape=(out_sds, out_sds, out_sds),
        grid=(pl.cdiv(M, tm),),                       # ragged last block handled by Pallas
        in_specs=[
            x_spec, x_spec, x_spec,
            pl.BlockSpec((E_out, E_in), lambda i: (0, 0)),   # weight stays resident
            pl.BlockSpec((1, E_out), lambda i: (0, 0)),      # bias stays resident
        ],
        out_specs=(o_spec, o_spec, o_spec),
        compiler_params=pltpu.CompilerParams(
            dimension_semantics=("parallel",),
            vmem_limit_bytes=budget,
        ),
    )(xq2, xk2, xv2, w, b2)


# ----------------------------------------------------------------------------
# Kernel 2: attention for all heads of one (batch, q-tile) per grid step.
#   in : Q block (1, tq, E), K/V blocks (1, S, E)   (lane-dense, no padding)
#   out: (1, tq, E) lane-dense slab == final (B, S, E) layout directly.
# Heads are static lane slices of width Dh; per-head results are concatenated
# along lanes so the output store is a single dense (tq, E) write.
# ----------------------------------------------------------------------------
def _attn_kernel(q_ref, k_ref, v_ref, o_ref, *, num_heads, head_dim):
    H, Dh = num_heads, head_dim
    qk_dn = (((1,), (1,)), ((), ()))   # (tq, Dh) x (S, Dh) -> (tq, S)
    pv_dn = (((1,), (0,)), ((), ()))   # (tq, S)  x (S, Dh) -> (tq, Dh)

    # TODO(synk): for very large H / S, bound live ranges with a fori_loop or
    #             a per-head scratch instead of this static unroll.
    outs = []
    for h in range(H):
        lo = h * Dh
        q = q_ref[0, :, lo:lo + Dh]            # (tq, Dh), scale already folded in
        k = k_ref[0, :, lo:lo + Dh]            # (S, Dh)
        v = v_ref[0, :, lo:lo + Dh]            # (S, Dh)

        s = jax.lax.dot_general(q, k, dimension_numbers=qk_dn,
                                preferred_element_type=jnp.float32)

        # numerically-stable softmax; max/exp/sum kept in f32
        m = jnp.max(s, axis=-1, keepdims=True)
        p = jnp.exp(s - m)
        denom = jnp.sum(p, axis=-1, keepdims=True)

        o = jax.lax.dot_general(p.astype(v.dtype), v, dimension_numbers=pv_dn,
                                preferred_element_type=jnp.float32)
        # divide hoisted after PV; approx reciprocal runs in the EUP slot
        o = o * pl.reciprocal(denom, approx=True)
        outs.append(o)

    # one lane-dense (tq, E) store per grid step
    o_ref[0, :, :] = jnp.concatenate(outs, axis=-1).astype(o_ref.dtype)


def _pick_tq(S, tq_max):
    for t in (512, 256, 128, 64, 32, 16, 8):
        if t <= min(S, tq_max) and S % t == 0:
            return t
    return S   # small / irregular S -> one full block


def attention(Q, K, V, num_heads, *, tq_max=256):
    # Q, K, V: (B, S, E)  ->  (B, S, E) f32
    B, S, E = Q.shape
    H = num_heads
    Dh = E // H
    tq = _pick_tq(S, tq_max)

    kern = functools.partial(_attn_kernel, num_heads=H, head_dim=Dh)
    q_spec = pl.BlockSpec((1, tq, E), lambda b, qi: (b, qi, 0))
    kv_spec = pl.BlockSpec((1, S, E), lambda b, qi: (b, 0, 0))   # resident across qi

    return pl.pallas_call(
        kern,
        out_shape=jax.ShapeDtypeStruct((B, S, E), jnp.float32),
        grid=(B, S // tq),
        in_specs=[q_spec, kv_spec, kv_spec],
        out_specs=pl.BlockSpec((1, tq, E), lambda b, qi: (b, qi, 0)),
        compiler_params=pltpu.CompilerParams(
            dimension_semantics=("parallel", "parallel"),
            vmem_limit_bytes=_vmem_limit_bytes(),
        ),
    )(Q, K, V)


# ----------------------------------------------------------------------------
# Full forward pass (mirrors MutilHeadAttention.forward with attn_mask=None)
# ----------------------------------------------------------------------------
def mha_forward(params, xq, xk, xv, num_heads, *, use_bf16=True,
                tm_max=512, tq_max=256):
    B, S, E = xq.shape
    assert E % num_heads == 0
    scale = float(E) ** (-0.5)            # module quirk: embed_dim ** -0.5
    wq, bq = params["wq"], params["bq"]   # linearK / linearV unused (module quirk)
    compute_dtype = jnp.bfloat16 if use_bf16 else jnp.float32

    # Fused QKV projection: one launch, resident weight, adaptive M-tiling,
    # bf16 intermediates on the fast path, scale folded into Q.
    Q2, K2, V2 = qkv_projection(
        xq.reshape(B * S, E), xk.reshape(B * S, E), xv.reshape(B * S, E),
        wq, bq, scale,
        compute_dtype=compute_dtype, out_dtype=compute_dtype, tm_max=tm_max)

    # Free metadata reshapes only — no host-level transposes.
    Q = Q2.reshape(B, S, E)
    K = K2.reshape(B, S, E)
    V = V2.reshape(B, S, E)

    # Attention writes the (B, S, E) output layout directly (lane-dense slabs).
    return attention(Q, K, V, num_heads, tq_max=tq_max)


# ----------------------------------------------------------------------------
# Pure-JAX reference for verification
# ----------------------------------------------------------------------------
def mha_reference(params, xq, xk, xv, num_heads):
    B, S, E = xq.shape
    H = num_heads
    Dh = E // H
    scale = float(E) ** (-0.5)
    wq, bq = params["wq"], params["bq"]

    def lin(x):
        return x @ wq.T + bq

    Q = lin(xq).reshape(B, S, H, Dh).transpose(0, 2, 1, 3)
    K = lin(xk).reshape(B, S, H, Dh).transpose(0, 2, 1, 3)
    V = lin(xv).reshape(B, S, H, Dh).transpose(0, 2, 1, 3)
    s = jnp.einsum("bhqd,bhkd->bhqk", Q, K) * scale
    p = jax.nn.softmax(s, axis=-1)
    o = jnp.einsum("bhqk,bhkd->bhqd", p, V)
    return o.transpose(0, 2, 1, 3).reshape(B, S, E)


# ----------------------------------------------------------------------------
# Self-test
# ----------------------------------------------------------------------------
def _run_case(key, B, S, E, H, *, tm_max, tq_max, name):
    kxq, kxk, kxv, kwq, kbq = jax.random.split(key, 5)
    xq = jax.random.normal(kxq, (B, S, E), dtype=jnp.float32)
    xk = jax.random.normal(kxk, (B, S, E), dtype=jnp.float32)
    xv = jax.random.normal(kxv, (B, S, E), dtype=jnp.float32)
    bound = 1.0 / (E ** 0.5)
    params = {
        "wq": jax.random.uniform(kwq, (E, E), jnp.float32, -bound, bound),
        "bq": jax.random.uniform(kbq, (E,), jnp.float32, -bound, bound),
    }
    ref = mha_reference(params, xq, xk, xv, H)

    # f32 MXU path (only approx-reciprocal normalization differs from exact).
    out = jax.block_until_ready(
        mha_forward(params, xq, xk, xv, H, use_bf16=False,
                    tm_max=tm_max, tq_max=tq_max))
    assert out.shape == (B, S, E)
    assert jnp.allclose(out, ref, atol=2e-3, rtol=2e-3), f"{name}: f32 mismatch"

    # bf16 MXU fast path (all generations): bf16 operands / intermediates,
    # f32 softmax and f32 accumulation.
    out_bf16 = jax.block_until_ready(
        mha_forward(params, xq, xk, xv, H, use_bf16=True,
                    tm_max=tm_max, tq_max=tq_max))
    assert jnp.allclose(out_bf16, ref, atol=7e-2, rtol=7e-2), f"{name}: bf16 mismatch"


if __name__ == "__main__":
    key = jax.random.PRNGKey(0)
    k_small, k_med = jax.random.split(key, 2)

    # Small, module-consistent shapes.
    _run_case(k_small, B=2, S=8, E=32, H=4, tm_max=512, tq_max=256, name="small")

    # Realistic-shape coverage of the tiled paths: Dh=64, multiple row tiles
    # in the projection and multiple q-tiles in attention.
    _run_case(k_med, B=2, S=128, E=256, H=4, tm_max=64, tq_max=64, name="medium")

    print("KERNEL_OK")
</pallas_src>

<mosaic_0001>
module attributes {stable_mosaic.version = 11 : i64} {
  func.func @_qkv_linear_kernel(%arg0: i32, %arg1: memref<16x32xf32, #tpu.memory_space<vmem>>, %arg2: memref<16x32xf32, #tpu.memory_space<vmem>>, %arg3: memref<16x32xf32, #tpu.memory_space<vmem>>, %arg4: memref<32x32xf32, #tpu.memory_space<vmem>>, %arg5: memref<1x32xf32, #tpu.memory_space<vmem>>, %arg6: memref<16x32xf32, #tpu.memory_space<vmem>>, %arg7: memref<16x32xf32, #tpu.memory_space<vmem>>, %arg8: memref<16x32xf32, #tpu.memory_space<vmem>>) attributes {dimension_semantics = [#tpu.dimension_semantics<parallel>], iteration_bounds = array<i64: 1>, scalar_prefetch = 0 : i64, scratch_operands = 0 : i64, tpu.core_type = #tpu.core_type<tc>, window_params = [{transform_indices = @transform_0, window_bounds = array<i64: 16, 32>}, {transform_indices = @transform_1, window_bounds = array<i64: 16, 32>}, {transform_indices = @transform_2, window_bounds = array<i64: 16, 32>}, {pipeline_mode = #tpu.pipeline_mode<synchronous>, transform_indices = @transform_3, window_bounds = array<i64: 32, 32>}, {pipeline_mode = #tpu.pipeline_mode<synchronous>, transform_indices = @transform_4, window_bounds = array<i64: 1, 32>}, {transform_indices = @transform_5, window_bounds = array<i64: 16, 32>}, {transform_indices = @transform_6, window_bounds = array<i64: 16, 32>}, {transform_indices = @transform_7, window_bounds = array<i64: 16, 32>}]} {
    %c0 = arith.constant 0 : index
    %c0_0 = arith.constant 0 : index
    %0 = vector.load %arg4[%c0, %c0_0] : memref<32x32xf32, #tpu.memory_space<vmem>>, vector<32x32xf32>
    %c0_1 = arith.constant 0 : index
    %c0_2 = arith.constant 0 : index
    %1 = vector.load %arg5[%c0_1, %c0_2] : memref<1x32xf32, #tpu.memory_space<vmem>>, vector<1x32xf32>
    %c0_3 = arith.constant 0 : index
    %c0_4 = arith.constant 0 : index
    %2 = vector.load %arg1[%c0_3, %c0_4] : memref<16x32xf32, #tpu.memory_space<vmem>>, vector<16x32xf32>
    %cst = arith.constant dense<0.000000e+00> : vector<16x32xf32>
    %3 = tpu.matmul %2, %0, %cst {dimension_numbers = #tpu.dot_dimension_numbers<[1], [1], [0], [0], [0, 0, 1, 0], [], []>} : vector<16x32xf32>, vector<32x32xf32>, vector<16x32xf32> -> vector<16x32xf32>
    %4 = vector.broadcast %1 : vector<1x32xf32> to vector<16x32xf32>
    %5 = arith.addf %3, %4 : vector<16x32xf32>
    %cst_5 = arith.constant 0.176776692 : f32
    %6 = vector.broadcast %cst_5 : f32 to vector<16x32xf32>
    %7 = arith.mulf %5, %6 : vector<16x32xf32>
    %c0_6 = arith.constant 0 : index
    %c0_7 = arith.constant 0 : index
    %8 = vector.load %arg6[%c0_6, %c0_7] : memref<16x32xf32, #tpu.memory_space<vmem>>, vector<16x32xf32>
    tpu.vector_store %arg6[%c0_6, %c0_7], %7 {strides = array<i32>} : memref<16x32xf32, #tpu.memory_space<vmem>>, vector<16x32xf32>,
    %c0_8 = arith.constant 0 : index
    %c0_9 = arith.constant 0 : index
    %9 = vector.load %arg2[%c0_8, %c0_9] : memref<16x32xf32, #tpu.memory_space<vmem>>, vector<16x32xf32>
    %cst_10 = arith.constant dense<0.000000e+00> : vector<16x32xf32>
    %10 = tpu.matmul %9, %0, %cst_10 {dimension_numbers = #tpu.dot_dimension_numbers<[1], [1], [0], [0], [0, 0, 1, 0], [], []>} : vector<16x32xf32>, vector<32x32xf32>, vector<16x32xf32> -> vector<16x32xf32>
    %11 = vector.broadcast %1 : vector<1x32xf32> to vector<16x32xf32>
    %12 = arith.addf %10, %11 : vector<16x32xf32>
    %c0_11 = arith.constant 0 : index
    %c0_12 = arith.constant 0 : index
    %13 = vector.load %arg7[%c0_11, %c0_12] : memref<16x32xf32, #tpu.memory_space<vmem>>, vector<16x32xf32>
    tpu.vector_store %arg7[%c0_11, %c0_12], %12 {strides = array<i32>} : memref<16x32xf32, #tpu.memory_space<vmem>>, vector<16x32xf32>,
    %c0_13 = arith.constant 0 : index
    %c0_14 = arith.constant 0 : index
    %14 = vector.load %arg3[%c0_13, %c0_14] : memref<16x32xf32, #tpu.memory_space<vmem>>, vector<16x32xf32>
    %cst_15 = arith.constant dense<0.000000e+00> : vector<16x32xf32>
    %15 = tpu.matmul %14, %0, %cst_15 {dimension_numbers = #tpu.dot_dimension_numbers<[1], [1], [0], [0], [0, 0, 1, 0], [], []>} : vector<16x32xf32>, vector<32x32xf32>, vector<16x32xf32> -> vector<16x32xf32>
    %16 = vector.broadcast %1 : vector<1x32xf32> to vector<16x32xf32>
    %17 = arith.addf %15, %16 : vector<16x32xf32>
    %c0_16 = arith.constant 0 : index
    %c0_17 = arith.constant 0 : index
    %18 = vector.load %arg8[%c0_16, %c0_17] : memref<16x32xf32, #tpu.memory_space<vmem>>, vector<16x32xf32>
    tpu.vector_store %arg8[%c0_16, %c0_17], %17 {strides = array<i32>} : memref<16x32xf32, #tpu.memory_space<vmem>>, vector<16x32xf32>,
    return
  }
  func.func @transform_0(%arg0: i32) -> (i32, i32) {
    %c0_i32 = arith.constant 0 : i32
    %c0_i32_0 = arith.constant 0 : i32
    return %arg0, %c0_i32 : i32, i32
  }
  func.func @transform_1(%arg0: i32) -> (i32, i32) {
    %c0_i32 = arith.constant 0 : i32
    %c0_i32_0 = arith.constant 0 : i32
    return %arg0, %c0_i32 : i32, i32
  }
  func.func @transform_2(%arg0: i32) -> (i32, i32) {
    %c0_i32 = arith.constant 0 : i32
    %c0_i32_0 = arith.constant 0 : i32
    return %arg0, %c0_i32 : i32, i32
  }
  func.func @transform_3(%arg0: i32) -> (i32, i32) {
    %c0_i32 = arith.constant 0 : i32
    %c0_i32_0 = arith.constant 0 : i32
    %c0_i32_1 = arith.constant 0 : i32
    return %c0_i32, %c0_i32_0 : i32, i32
  }
  func.func @transform_4(%arg0: i32) -> (i32, i32) {
    %c0_i32 = arith.constant 0 : i32
    %c0_i32_0 = arith.constant 0 : i32
    %c0_i32_1 = arith.constant 0 : i32
    return %c0_i32, %c0_i32_0 : i32, i32
  }
  func.func @transform_5(%arg0: i32) -> (i32, i32) {
    %c0_i32 = arith.constant 0 : i32
    %c0_i32_0 = arith.constant 0 : i32
    return %arg0, %c0_i32 : i32, i32
  }
  func.func @transform_6(%arg0: i32) -> (i32, i32) {
    %c0_i32 = arith.constant 0 : i32
    %c0_i32_0 = arith.constant 0 : i32
    return %arg0, %c0_i32 : i32, i32
  }
  func.func @transform_7(%arg0: i32) -> (i32, i32) {
    %c0_i32 = arith.constant 0 : i32
    %c0_i32_0 = arith.constant 0 : i32
    return %arg0, %c0_i32 : i32, i32
  }
}

</mosaic_0001>

<llo_original>
// kernel: tpu_custom_call.1
$region0: #{tpu_custom_call.1}
  #allocation0 [shape = 'u32[]', space=smem, size = 0x4, offset = 0x4, fixed_abs, tag = 'smem constant byte address 0x4 - core index']
  #allocation1 [shape = 'u32[144,128]{1,0:T(1,128)}', space=vmem, size = 0x12000, scoped, tag = 'internal scratch']
  %s0 = inlined_call_operand.hbm [shape: f32[16,32], index: 0, kind: input, shape index: {}]
  %s1 = inlined_call_operand.hbm [shape: f32[16,32], index: 1, kind: input, shape index: {}]
  %s2 = inlined_call_operand.hbm [shape: f32[16,32], index: 2, kind: input, shape index: {}]
  %s3 = inlined_call_operand.hbm [shape: f32[32,32], index: 3, kind: input, shape index: {}]
  %s4 = inlined_call_operand.vmem [shape: f32[1,32], index: 4, kind: input, shape index: {}]
  %s5 = inlined_call_operand.hbm [shape: f32[16,32], index: 5, kind: output, shape index: {0}]
  %s6 = inlined_call_operand.hbm [shape: f32[16,32], index: 6, kind: output, shape index: {1}]
  %s7 = inlined_call_operand.hbm [shape: f32[16,32], index: 7, kind: output, shape index: {2}]
  %8 = xla_tuple %s5, %s6, %s7
  %s9 = sld [smem:[#allocation0]]
  $region62: #{tpu_custom_call.1} parent=0
    _
  %s11 = ssub.s32 1, %s9
  %s12 = scalar_select 0, %s11, %s9
  $region1: #{tpu_custom_call.1} parent=0
    #allocation2 [shape = 'u8[8192]{0}', space=vmem, size = 0x2000, scoped, tag = 'input window, operand 0, single buffered']
    #allocation3 [shape = 's32[1]{0}', space=sflag, size = 0x4, scoped, tag = 'scoped memory for tpu_custom_call.1']
    #allocation4 [shape = 's32[1]{0}', space=sflag, size = 0x4, scoped, tag = 'scoped memory for tpu_custom_call.1']
    #allocation5 [shape = 'u8[8192]{0}', space=vmem, size = 0x2000, scoped, tag = 'input window, operand 1, single buffered']
    #allocation6 [shape = 's32[1]{0}', space=sflag, size = 0x4, scoped, tag = 'scoped memory for tpu_custom_call.1']
    #allocation7 [shape = 'u8[8192]{0}', space=vmem, size = 0x2000, scoped, tag = 'input window, operand 2, single buffered']
    #allocation8 [shape = 'u8[16384]{0}', space=vmem, size = 0x4000, scoped, tag = 'input window, operand 3, single buffered']
    #allocation9 [shape = 's32[1]{0}', space=sflag, size = 0x4, scoped, tag = 'scoped memory for tpu_custom_call.1']
    #allocation10 [shape = 'u8[8192]{0}', space=vmem, size = 0x2000, scoped, tag = 'output window, operand 0, single buffered']
    #allocation11 [shape = 'u8[8192]{0}', space=vmem, size = 0x2000, scoped, tag = 'output window, operand 1, single buffered']
    #allocation12 [shape = 's32[1]{0}', space=sflag, size = 0x4, scoped, tag = 'scoped memory for tpu_custom_call.1']
    #allocation13 [shape = 'u8[8192]{0}', space=vmem, size = 0x2000, scoped, tag = 'output window, operand 2, single buffered']
    %13 = vsyncpa [#allocation3], 0
    %14 = vsyncpa [#allocation6], 0
    %15 = vsyncpa [#allocation9], 0
    %16 = vsyncpa [#allocation4], 0
    %17 = vsyncpa [#allocation12], 0
    // Predicated region
    $region2: #{tpu_custom_call.1} parent=1 // pred_check
      _
    $region3: #{tpu_custom_call.1} parent=1 // pred_check_branch
      %19 = sbr.rel (0) target = $region5
    $region4: #{tpu_custom_call.1} parent=1 // pred_region
      %s21 = ssub.s32 256, 256
      %22 = vsyncadd [#allocation3], %s21
      %s23 = sshll.u32 [#allocation2], 4
      %s24 = int_to_ptr.vmem [resolvable:$true] %s23
      %29 = dma.hbm_to_vmem [thread:$0]  %s0, 256, %s24, [#allocation3], 128, 128, 8
    $region5: #{tpu_custom_call.1} parent=1 // pred_fallthru
      _
    // Predicated region
    $region6: #{tpu_custom_call.1} parent=1 // pred_check
      _
    $region7: #{tpu_custom_call.1} parent=1 // pred_check_branch
      %31 = sbr.rel (0) target = $region9
    $region8: #{tpu_custom_call.1} parent=1 // pred_region
      %s33 = ssub.s32 256, 256
      %34 = vsyncadd [#allocation6], %s33
      %s35 = sshll.u32 [#allocation5], 4
      %s36 = int_to_ptr.vmem [resolvable:$true] %s35
      %41 = dma.hbm_to_vmem [thread:$0]  %s1, 256, %s36, [#allocation6], 128, 128, 8
    $region9: #{tpu_custom_call.1} parent=1 // pred_fallthru
      _
    // Predicated region
    $region10: #{tpu_custom_call.1} parent=1 // pred_check
      _
    $region11: #{tpu_custom_call.1} parent=1 // pred_check_branch
      %43 = sbr.rel (0) target = $region13
    $region12: #{tpu_custom_call.1} parent=1 // pred_region
      %s45 = ssub.s32 256, 256
      %46 = vsyncadd [#allocation6], %s45
      %s47 = sshll.u32 [#allocation7], 4
      %s48 = int_to_ptr.vmem [resolvable:$true] %s47
      %53 = dma.hbm_to_vmem [thread:$0]  %s2, 256, %s48, [#allocation6], 128, 128, 8
    $region13: #{tpu_custom_call.1} parent=1 // pred_fallthru
      _
    // Predicated region
    $region14: #{tpu_custom_call.1} parent=1 // pred_check
      _
    $region15: #{tpu_custom_call.1} parent=1 // pred_check_branch
      %55 = sbr.rel (0) target = $region17
    $region16: #{tpu_custom_call.1} parent=1 // pred_region
      %s57 = ssub.s32 512, 512
      %58 = vsyncadd [#allocation9], %s57
      %s59 = sshll.u32 [#allocation8], 4
      %s60 = int_to_ptr.vmem [resolvable:$true] %s59
      %65 = dma.hbm_to_vmem [thread:$0]  %s3, 512, %s60, [#allocation9], 128, 128, 8
    $region17: #{tpu_custom_call.1} parent=1 // pred_fallthru
      _
    // Predicated region
    $region18: #{tpu_custom_call.1} parent=1 // pred_check
      _
    $region19: #{tpu_custom_call.1} parent=1 // pred_check_branch
      %67 = sbr.rel (0) target = $region21
    $region20: #{tpu_custom_call.1} parent=1 // pred_region
      _
    $region21: #{tpu_custom_call.1} parent=1 // pred_fallthru
      _
    // Predicated region
    $region22: #{tpu_custom_call.1} parent=1 // pred_check
      _
    $region23: #{tpu_custom_call.1} parent=1 // pred_check_branch
      %69 = sbr.rel (0) target = $region25
    $region24: #{tpu_custom_call.1} parent=1 // pred_region
      %70 = dma.done [#allocation3], 256
    $region25: #{tpu_custom_call.1} parent=1 // pred_fallthru
      _
    // Predicated region
    $region26: #{tpu_custom_call.1} parent=1 // pred_check
      _
    $region27: #{tpu_custom_call.1} parent=1 // pred_check_branch
      %72 = sbr.rel (0) target = $region29
    $region28: #{tpu_custom_call.1} parent=1 // pred_region
      %73 = dma.done [#allocation6], 256
    $region29: #{tpu_custom_call.1} parent=1 // pred_fallthru
      _
    // Predicated region
    $region30: #{tpu_custom_call.1} parent=1 // pred_check
      _
    $region31: #{tpu_custom_call.1} parent=1 // pred_check_branch
      %75 = sbr.rel (0) target = $region33
    $region32: #{tpu_custom_call.1} parent=1 // pred_region
      %76 = dma.done [#allocation6], 256
    $region33: #{tpu_custom_call.1} parent=1 // pred_fallthru
      _
    // Predicated region
    $region34: #{tpu_custom_call.1} parent=1 // pred_check
      _
    $region35: #{tpu_custom_call.1} parent=1 // pred_check_branch
      %78 = sbr.rel (0) target = $region37
    $region36: #{tpu_custom_call.1} parent=1 // pred_region
      %79 = dma.done [#allocation9], 512
    $region37: #{tpu_custom_call.1} parent=1 // pred_fallthru
      _
    %v80 = vld [vmem:[#allocation8] sm:$0xff]
    %v81 = vld [vmem:[#allocation8 + $0x8] sm:$0xff]
    %v82 = vld [vmem:[#allocation8 + $0x10] sm:$0xff]
    %v83 = vld [vmem:[#allocation8 + $0x18] sm:$0xff]
    %v84 = vld [vmem:[%s4] sm:$0x1]
    %v85 = vld [vmem:[#allocation2] sm:$0xff]
    %v86 = vld [vmem:[#allocation2 + $0x8] sm:$0xff]
    %v88 = vlaneseq
    %v89 = vshrl.u32 %v88, 7
    %v90 = vsub.s32 0, %v89
    %v91 = vrot.slane %v84, %v90
    %vm93 = vcmask 261120
    %v95 = vsel %vm93, %v85, 0
    %v98 = vsel %vm93, %v86, 0
    %v101 = vsel %vm93, %v80, 0
    %v104 = vsel %vm93, %v81, 0
    %v107 = vsel %vm93, %v82, 0
    %v110 = vsel %vm93, %v83, 0
    %112 = vmatprep.subr.mxu0 0.0
    %113 = vmatpush1.xpose.msra.mxu0 0.0
    %114 = vmatprep.subr.mxu0 0.0
    %115 = vmatpush1.xpose.msra.mxu0 0.0
    %116 = vmatprep.subr.mxu0 0.0
    %117 = vmatpush1.xpose.msra.mxu0 0.0
    %118 = vmatprep.subr.mxu0 0.0
    %119 = vmatpush1.xpose.msra.mxu0 0.0
    %120 = vmatprep.subr.mxu0 0.0
    %121 = vmatpush1.xpose.msra.mxu0 0.0
    %122 = vmatprep.subr.mxu0 0.0
    %123 = vmatpush1.xpose.msra.mxu0 0.0
    %124 = vmatprep.subr.mxu0 0.0
    %125 = vmatpush1.xpose.msra.mxu0 0.0
    %126 = vmatprep.subr.mxu0 0.0
    %127 = vmatpush1.xpose.msra.mxu0 0.0
    %128 = vmatprep.subr.mxu0 0.0
    %129 = vmatpush1.xpose.msra.mxu0 0.0
    %130 = vmatprep.subr.mxu0 0.0
    %131 = vmatpush1.xpose.msra.mxu0 0.0
    %132 = vmatprep.subr.mxu0 0.0
    %133 = vmatpush1.xpose.msra.mxu0 0.0
    %134 = vmatprep.subr.mxu0 0.0
    %135 = vmatpush1.xpose.msra.mxu0 0.0
    %136 = vmatprep.subr.mxu0 0.0
    %137 = vmatpush1.xpose.msra.mxu0 %v110
    %138 = vmatprep.subr.mxu0 0.0
    %139 = vmatpush1.xpose.msra.mxu0 %v107
    %140 = vmatprep.subr.mxu0 0.0
    %141 = vmatpush1.xpose.msra.mxu0 %v104
    %142 = vmatprep.subr.mxu0 0.0
    %143 = vmatpush1.xpose.msra.mxu0 %v101
    %144 = vmatprep.subr.mxu0 0.0
    %145 = vmatpush2.xpose.msra.mxu0 0.0
    %146 = vmatprep.subr.mxu0 0.0
    %147 = vmatpush2.xpose.msra.mxu0 0.0
    %148 = vmatprep.subr.mxu0 0.0
    %149 = vmatpush2.xpose.msra.mxu0 0.0
    %150 = vmatprep.subr.mxu0 0.0
    %151 = vmatpush2.xpose.msra.mxu0 0.0
    %152 = vmatprep.subr.mxu0 0.0
    %153 = vmatpush2.xpose.msra.mxu0 0.0
    %154 = vmatprep.subr.mxu0 0.0
    %155 = vmatpush2.xpose.msra.mxu0 0.0
    %156 = vmatprep.subr.mxu0 0.0
    %157 = vmatpush2.xpose.msra.mxu0 0.0
    %158 = vmatprep.subr.mxu0 0.0
    %159 = vmatpush2.xpose.msra.mxu0 0.0
    %160 = vmatprep.subr.mxu0 0.0
    %161 = vmatpush2.xpose.msra.mxu0 0.0
    %162 = vmatprep.subr.mxu0 0.0
    %163 = vmatpush2.xpose.msra.mxu0 0.0
    %164 = vmatprep.subr.mxu0 0.0
    %165 = vmatpush2.xpose.msra.mxu0 0.0
    %166 = vmatprep.subr.mxu0 0.0
    %167 = vmatpush2.xpose.msra.mxu0 0.0
    %168 = vmatprep.subr.mxu0 0.0
    %169 = vmatpush2.xpose.msra.mxu0 0.0
    %170 = vmatprep.subr.mxu0 0.0
    %171 = vmatpush2.xpose.msra.mxu0 0.0
    %172 = vmatprep.subr.mxu0 0.0
    %173 = vmatpush2.xpose.msra.mxu0 0.0
    %174 = vmatprep.subr.mxu0 0.0
    %175 = vmatpush2.xpose.msra.mxu0 0.0
    %176 = vmatprep.mubr.f32.mxu0 0.0
    %177 = vmatmul.mubr.f32.gmra.mxu0 %v95
    %v178 = vpop.f32.mrf.mxu0
    %v179 = vadd.f32 %v91, %v178
    %v180 = vpop.f32.mrf.mxu0
    %181 = vmatprep.mubr.f32.mxu0 0.0
    %182 = vmatmul.mubr.f32.gmra.mxu0 %v98
    %v183 = vpop.f32.mrf.mxu0
    %v184 = vadd.f32 %v91, %v183
    %v185 = vpop.f32.mrf.mxu0
    %186 = vdwg.mxu0
    %v187 = vmul.f32 %v179, 0.17677669
    %v188 = vmul.f32 %v184, 0.17677669
    %189 = vst.msk [vmem:[#allocation10] sm:$0xff] %vm93, %v187
    %190 = vst.msk [vmem:[#allocation10 + $0x8] sm:$0xff] %vm93, %v188
    %v191 = vld [vmem:[#allocation5] sm:$0xff]
    %v192 = vld [vmem:[#allocation5 + $0x8] sm:$0xff]
    %v194 = vsel %vm93, %v191, 0
    %v197 = vsel %vm93, %v192, 0
    %199 = vmatprep.subr.mxu0 0.0
    %200 = vmatpush1.xpose.msra.mxu0 0.0
    %201 = vmatprep.subr.mxu0 0.0
    %202 = vmatpush1.xpose.msra.mxu0 0.0
    %203 = vmatprep.subr.mxu0 0.0
    %204 = vmatpush1.xpose.msra.mxu0 0.0
    %205 = vmatprep.subr.mxu0 0.0
    %206 = vmatpush1.xpose.msra.mxu0 0.0
    %207 = vmatprep.subr.mxu0 0.0
    %208 = vmatpush1.xpose.msra.mxu0 0.0
    %209 = vmatprep.subr.mxu0 0.0
    %210 = vmatpush1.xpose.msra.mxu0 0.0
    %211 = vmatprep.subr.mxu0 0.0
    %212 = vmatpush1.xpose.msra.mxu0 0.0
    %213 = vmatprep.subr.mxu0 0.0
    %214 = vmatpush1.xpose.msra.mxu0 0.0
    %215 = vmatprep.subr.mxu0 0.0
    %216 = vmatpush1.xpose.msra.mxu0 0.0
    %217 = vmatprep.subr.mxu0 0.0
    %218 = vmatpush1.xpose.msra.mxu0 0.0
    %219 = vmatprep.subr.mxu0 0.0
    %220 = vmatpush1.xpose.msra.mxu0 0.0
    %221 = vmatprep.subr.mxu0 0.0
    %222 = vmatpush1.xpose.msra.mxu0 0.0
    %223 = vmatprep.subr.mxu0 0.0
    %224 = vmatpush1.xpose.msra.mxu0 %v110
    %225 = vmatprep.subr.mxu0 0.0
    %226 = vmatpush1.xpose.msra.mxu0 %v107
    %227 = vmatprep.subr.mxu0 0.0
    %228 = vmatpush1.xpose.msra.mxu0 %v104
    %229 = vmatprep.subr.mxu0 0.0
    %230 = vmatpush1.xpose.msra.mxu0 %v101
    %231 = vmatprep.subr.mxu0 0.0
    %232 = vmatpush2.xpose.msra.mxu0 0.0
    %233 = vmatprep.subr.mxu0 0.0
    %234 = vmatpush2.xpose.msra.mxu0 0.0
    %235 = vmatprep.subr.mxu0 0.0
    %236 = vmatpush2.xpose.msra.mxu0 0.0
    %237 = vmatprep.subr.mxu0 0.0
    %238 = vmatpush2.xpose.msra.mxu0 0.0
    %239 = vmatprep.subr.mxu0 0.0
    %240 = vmatpush2.xpose.msra.mxu0 0.0
    %241 = vmatprep.subr.mxu0 0.0
    %242 = vmatpush2.xpose.msra.mxu0 0.0
    %243 = vmatprep.subr.mxu0 0.0
    %244 = vmatpush2.xpose.msra.mxu0 0.0
    %245 = vmatprep.subr.mxu0 0.0
    %246 = vmatpush2.xpose.msra.mxu0 0.0
    %247 = vmatprep.subr.mxu0 0.0
    %248 = vmatpush2.xpose.msra.mxu0 0.0
    %249 = vmatprep.subr.mxu0 0.0
    %250 = vmatpush2.xpose.msra.mxu0 0.0
    %251 = vmatprep.subr.mxu0 0.0
    %252 = vmatpush2.xpose.msra.mxu0 0.0
    %253 = vmatprep.subr.mxu0 0.0
    %254 = vmatpush2.xpose.msra.mxu0 0.0
    %255 = vmatprep.subr.mxu0 0.0
    %256 = vmatpush2.xpose.msra.mxu0 0.0
    %257 = vmatprep.subr.mxu0 0.0
    %258 = vmatpush2.xpose.msra.mxu0 0.0
    %259 = vmatprep.subr.mxu0 0.0
    %260 = vmatpush2.xpose.msra.mxu0 0.0
    %261 = vmatprep.subr.mxu0 0.0
    %262 = vmatpush2.xpose.msra.mxu0 0.0
    %263 = vmatprep.mubr.f32.mxu0 0.0
    %264 = vmatmul.mubr.f32.gmra.mxu0 %v194
    %v265 = vpop.f32.mrf.mxu0
    %v266 = vadd.f32 %v91, %v265
    %v267 = vpop.f32.mrf.mxu0
    %268 = vmatprep.mubr.f32.mxu0 0.0
    %269 = vmatmul.mubr.f32.gmra.mxu0 %v197
    %v270 = vpop.f32.mrf.mxu0
    %v271 = vadd.f32 %v91, %v270
    %v272 = vpop.f32.mrf.mxu0
    %273 = vdwg.mxu0
    %274 = vst.msk [vmem:[#allocation11] sm:$0xff] %vm93, %v266
    %275 = vst.msk [vmem:[#allocation11 + $0x8] sm:$0xff] %vm93, %v271
    %v276 = vld [vmem:[#allocation7] sm:$0xff]
    %v277 = vld [vmem:[#allocation7 + $0x8] sm:$0xff]
    %v279 = vsel %vm93, %v276, 0
    %v282 = vsel %vm93, %v277, 0
    %284 = vmatprep.subr.mxu0 0.0
    %285 = vmatpush1.xpose.msra.mxu0 0.0
    %286 = vmatprep.subr.mxu0 0.0
    %287 = vmatpush1.xpose.msra.mxu0 0.0
    %288 = vmatprep.subr.mxu0 0.0
    %289 = vmatpush1.xpose.msra.mxu0 0.0
    %290 = vmatprep.subr.mxu0 0.0
    %291 = vmatpush1.xpose.msra.mxu0 0.0
    %292 = vmatprep.subr.mxu0 0.0
    %293 = vmatpush1.xpose.msra.mxu0 0.0
    %294 = vmatprep.subr.mxu0 0.0
    %295 = vmatpush1.xpose.msra.mxu0 0.0
    %296 = vmatprep.subr.mxu0 0.0
    %297 = vmatpush1.xpose.msra.mxu0 0.0
    %298 = vmatprep.subr.mxu0 0.0
    %299 = vmatpush1.xpose.msra.mxu0 0.0
    %300 = vmatprep.subr.mxu0 0.0
    %301 = vmatpush1.xpose.msra.mxu0 0.0
    %302 = vmatprep.subr.mxu0 0.0
    %303 = vmatpush1.xpose.msra.mxu0 0.0
    %304 = vmatprep.subr.mxu0 0.0
    %305 = vmatpush1.xpose.msra.mxu0 0.0
    %306 = vmatprep.subr.mxu0 0.0
    %307 = vmatpush1.xpose.msra.mxu0 0.0
    %308 = vmatprep.subr.mxu0 0.0
    %309 = vmatpush1.xpose.msra.mxu0 %v110
    %310 = vmatprep.subr.mxu0 0.0
    %311 = vmatpush1.xpose.msra.mxu0 %v107
    %312 = vmatprep.subr.mxu0 0.0
    %313 = vmatpush1.xpose.msra.mxu0 %v104
    %314 = vmatprep.subr.mxu0 0.0
    %315 = vmatpush1.xpose.msra.mxu0 %v101
    %316 = vmatprep.subr.mxu0 0.0
    %317 = vmatpush2.xpose.msra.mxu0 0.0
    %318 = vmatprep.subr.mxu0 0.0
    %319 = vmatpush2.xpose.msra.mxu0 0.0
    %320 = vmatprep.subr.mxu0 0.0
    %321 = vmatpush2.xpose.msra.mxu0 0.0
    %322 = vmatprep.subr.mxu0 0.0
    %323 = vmatpush2.xpose.msra.mxu0 0.0
    %324 = vmatprep.subr.mxu0 0.0
    %325 = vmatpush2.xpose.msra.mxu0 0.0
    %326 = vmatprep.subr.mxu0 0.0
    %327 = vmatpush2.xpose.msra.mxu0 0.0
    %328 = vmatprep.subr.mxu0 0.0
    %329 = vmatpush2.xpose.msra.mxu0 0.0
    %330 = vmatprep.subr.mxu0 0.0
    %331 = vmatpush2.xpose.msra.mxu0 0.0
    %332 = vmatprep.subr.mxu0 0.0
    %333 = vmatpush2.xpose.msra.mxu0 0.0
    %334 = vmatprep.subr.mxu0 0.0
    %335 = vmatpush2.xpose.msra.mxu0 0.0
    %336 = vmatprep.subr.mxu0 0.0
    %337 = vmatpush2.xpose.msra.mxu0 0.0
    %338 = vmatprep.subr.mxu0 0.0
    %339 = vmatpush2.xpose.msra.mxu0 0.0
    %340 = vmatprep.subr.mxu0 0.0
    %341 = vmatpush2.xpose.msra.mxu0 0.0
    %342 = vmatprep.subr.mxu0 0.0
    %343 = vmatpush2.xpose.msra.mxu0 0.0
    %344 = vmatprep.subr.mxu0 0.0
    %345 = vmatpush2.xpose.msra.mxu0 0.0
    %346 = vmatprep.subr.mxu0 0.0
    %347 = vmatpush2.xpose.msra.mxu0 0.0
    %348 = vmatprep.mubr.f32.mxu0 0.0
    %349 = vmatmul.mubr.f32.gmra.mxu0 %v279
    %v350 = vpop.f32.mrf.mxu0
    %v351 = vadd.f32 %v91, %v350
    %v352 = vpop.f32.mrf.mxu0
    %353 = vmatprep.mubr.f32.mxu0 0.0
    %354 = vmatmul.mubr.f32.gmra.mxu0 %v282
    %v355 = vpop.f32.mrf.mxu0
    %v356 = vadd.f32 %v91, %v355
    %v357 = vpop.f32.mrf.mxu0
    %358 = vdwg.mxu0
    %359 = vst.msk [vmem:[#allocation13] sm:$0xff] %vm93, %v351
    %360 = vst.msk [vmem:[#allocation13 + $0x8] sm:$0xff] %vm93, %v356
    // Predicated region
    $region38: #{tpu_custom_call.1} parent=1 // pred_check
      _
    $region39: #{tpu_custom_call.1} parent=1 // pred_check_branch
      %362 = sbr.rel (0) target = $region41
    $region40: #{tpu_custom_call.1} parent=1 // pred_region
      %s364 = ssub.s32 256, 256
      %365 = vsyncadd [#allocation4], %s364
      %s366 = sshll.u32 [#allocation10], 4
      %s367 = int_to_ptr.vmem [resolvable:$true] %s366
      %372 = dma.vmem_to_hbm [thread:$0]  %s367, 256, %s5, [#allocation4], 128, 128, 8
    $region41: #{tpu_custom_call.1} parent=1 // pred_fallthru
      _
    // Predicated region
    $region42: #{tpu_custom_call.1} parent=1 // pred_check
      _
    $region43: #{tpu_custom_call.1} parent=1 // pred_check_branch
      %374 = sbr.rel (0) target = $region45
    $region44: #{tpu_custom_call.1} parent=1 // pred_region
      %s376 = ssub.s32 256, 256
      %377 = vsyncadd [#allocation12], %s376
      %s378 = sshll.u32 [#allocation11], 4
      %s379 = int_to_ptr.vmem [resolvable:$true] %s378
      %384 = dma.vmem_to_hbm [thread:$0]  %s379, 256, %s6, [#allocation12], 128, 128, 8
    $region45: #{tpu_custom_call.1} parent=1 // pred_fallthru
      _
    // Predicated region
    $region46: #{tpu_custom_call.1} parent=1 // pred_check
      _
    $region47: #{tpu_custom_call.1} parent=1 // pred_check_branch
      %386 = sbr.rel (0) target = $region49
    $region48: #{tpu_custom_call.1} parent=1 // pred_region
      %s388 = ssub.s32 256, 256
      %389 = vsyncadd [#allocation12], %s388
      %s390 = sshll.u32 [#allocation13], 4
      %s391 = int_to_ptr.vmem [resolvable:$true] %s390
      %396 = dma.vmem_to_hbm [thread:$0]  %s391, 256, %s7, [#allocation12], 128, 128, 8
    $region49: #{tpu_custom_call.1} parent=1 // pred_fallthru
      _
    // Predicated region
    $region50: #{tpu_custom_call.1} parent=1 // pred_check
      _
    $region51: #{tpu_custom_call.1} parent=1 // pred_check_branch
      %398 = sbr.rel (0) target = $region53
    $region52: #{tpu_custom_call.1} parent=1 // pred_region
      %399 = dma.done [#allocation4], 256
    $region53: #{tpu_custom_call.1} parent=1 // pred_fallthru
      _
    // Predicated region
    $region54: #{tpu_custom_call.1} parent=1 // pred_check
      _
    $region55: #{tpu_custom_call.1} parent=1 // pred_check_branch
      %401 = sbr.rel (0) target = $region57
    $region56: #{tpu_custom_call.1} parent=1 // pred_region
      %402 = dma.done [#allocation12], 256
    $region57: #{tpu_custom_call.1} parent=1 // pred_fallthru
      _
    // Predicated region
    $region58: #{tpu_custom_call.1} parent=1 // pred_check
      _
    $region59: #{tpu_custom_call.1} parent=1 // pred_check_branch
      %404 = sbr.rel (0) target = $region61
    $region60: #{tpu_custom_call.1} parent=1 // pred_region
      %405 = dma.done [#allocation12], 256
    $region61: #{tpu_custom_call.1} parent=1 // pred_fallthru
      _
    %406 = vsyncpa [#allocation3], 1
    %407 = vsyncpa [#allocation6], 1
    %408 = vsyncpa [#allocation9], 1
    %409 = vsyncpa [#allocation4], 1
    %410 = vsyncpa [#allocation12], 1

</llo_original>
